<compile_context>
chip_gen: v5e
topology: v5e:2x2
jax: 0.10.0
libtpu: 0.0.40
codegen_flags: <defaults>
</compile_context>

<pallas_src>
import jax
import jax.numpy as jnp
from jax.experimental import pallas as pl
from jax.experimental.pallas import tpu as pltpu

_LANE = 128
_SUBLANE = 8
_TARGET_BLOCK_BYTES = 2 * 1024 * 1024  # ~2 MiB per block, safe on all generations


def _make_kernel(minimum: float, maximum: float, leaky_coef: float):
    """Build an elementwise clip kernel with constants folded at trace time."""
    if leaky_coef == 0.0:
        def kernel(x_ref, o_ref):
            x = x_ref[...]
            o_ref[...] = jnp.minimum(jnp.maximum(x, minimum), maximum)
    else:
        lo_c = minimum - 5.0 * leaky_coef
        hi_c = maximum + 5.0 * leaky_coef

        def kernel(x_ref, o_ref):
            x = x_ref[...]
            lx = leaky_coef * x                       # single shared product
            o_ref[...] = jnp.minimum(jnp.maximum(x, lx + lo_c), lx + hi_c)
    return kernel


def input_clip(x, minimum: float = -5.0, maximum: float = 5.0, leaky_coef: float = 0.0):
    """Pallas TPU implementation of InputClip.forward. Works for any shape/dtype."""
    orig_shape = x.shape
    n = x.size
    if n == 0:
        return x

    # Lane-friendly 2-D view (rows, 128). Only pad the (<128 element) remainder.
    flat = x.reshape(-1)
    pad = (-n) % _LANE
    if pad:
        flat = jnp.pad(flat, (0, pad))
    rows = flat.shape[0] // _LANE
    x2d = flat.reshape(rows, _LANE)

    # Pick a large row block (~2 MiB) — multiple of 8, or full extent if small.
    bytes_per_row = _LANE * x2d.dtype.itemsize
    row_block = max(_SUBLANE, (_TARGET_BLOCK_BYTES // bytes_per_row) // _SUBLANE * _SUBLANE)
    if row_block >= rows:
        row_block = rows  # full-extent block: no (8,128) divisibility requirement
    grid = (pl.cdiv(rows, row_block),)  # partial last block handled by Pallas bounds

    kernel = _make_kernel(float(minimum), float(maximum), float(leaky_coef))

    out2d = pl.pallas_call(
        kernel,
        out_shape=jax.ShapeDtypeStruct((rows, _LANE), x2d.dtype),
        grid_spec=pltpu.PrefetchScalarGridSpec(
            num_scalar_prefetch=0,
            grid=grid,
            in_specs=[pl.BlockSpec((row_block, _LANE), lambda i: (i, 0))],
            out_specs=pl.BlockSpec((row_block, _LANE), lambda i: (i, 0)),
        ),
        compiler_params=pltpu.CompilerParams(
            dimension_semantics=("parallel",),
        ),
    )(x2d)

    out_flat = out2d.reshape(-1)
    if pad:
        out_flat = out_flat[:n]
    return out_flat.reshape(orig_shape)


def _reference(x, minimum=-5.0, maximum=5.0, leaky_coef=0.0):
    lo = minimum + leaky_coef * (x - 5.0)
    hi = maximum + leaky_coef * (x + 5.0)
    return jnp.minimum(jnp.maximum(x, lo), hi)


if __name__ == "__main__":
    key = jax.random.PRNGKey(0)
    k0, k1, k2 = jax.random.split(key, 3)

    # Small NCHW input consistent with a conv-style pipeline (aligned path, grid=1).
    x = jax.random.normal(k0, (2, 4, 16, 16), dtype=jnp.float32) * 10.0
    # Non-128-aligned shape (exercises minimal lane padding).
    x_odd = jax.random.normal(k1, (2, 3, 7, 11), dtype=jnp.float32) * 10.0
    # Larger input (exercises multiple grid steps + partial last row block).
    x_big = jax.random.normal(k2, (4, 8, 128, 160), dtype=jnp.float32) * 10.0

    cases = [
        (x, -5.0, 5.0, 0.0),
        (x, -5.0, 5.0, 0.1),
        (x_odd, -3.0, 3.0, 0.05),
        (x_big, -5.0, 5.0, 0.1),
    ]

    for xi, mn, mx, lc in cases:
        y = jax.block_until_ready(input_clip(xi, mn, mx, lc))
        ref = _reference(xi, mn, mx, lc)
        assert y.shape == xi.shape and y.dtype == xi.dtype
        assert jnp.allclose(y, ref, atol=1e-6, rtol=1e-6)

    print("KERNEL_OK")
</pallas_src>

<mosaic_0001>
module attributes {stable_mosaic.version = 11 : i64} {
  func.func @kernel(%arg0: i32, %arg1: memref<16x128xf32, #tpu.memory_space<vmem>>, %arg2: memref<16x128xf32, #tpu.memory_space<vmem>>) attributes {dimension_semantics = [#tpu.dimension_semantics<parallel>], iteration_bounds = array<i64: 1>, scalar_prefetch = 0 : i64, scratch_operands = 0 : i64, tpu.core_type = #tpu.core_type<tc>, window_params = [{transform_indices = @transform_0, window_bounds = array<i64: 16, 128>}, {transform_indices = @transform_1, window_bounds = array<i64: 16, 128>}]} {
    %c0 = arith.constant 0 : index
    %c0_0 = arith.constant 0 : index
    %0 = vector.load %arg1[%c0, %c0_0] : memref<16x128xf32, #tpu.memory_space<vmem>>, vector<16x128xf32>
    %cst = arith.constant -5.000000e+00 : f32
    %1 = vector.broadcast %cst : f32 to vector<16x128xf32>
    %2 = arith.maximumf %0, %1 : vector<16x128xf32>
    %cst_1 = arith.constant 5.000000e+00 : f32
    %3 = vector.broadcast %cst_1 : f32 to vector<16x128xf32>
    %4 = arith.minimumf %2, %3 : vector<16x128xf32>
    %c0_2 = arith.constant 0 : index
    %c0_3 = arith.constant 0 : index
    %5 = vector.load %arg2[%c0_2, %c0_3] : memref<16x128xf32, #tpu.memory_space<vmem>>, vector<16x128xf32>
    tpu.vector_store %arg2[%c0_2, %c0_3], %4 {strides = array<i32>} : memref<16x128xf32, #tpu.memory_space<vmem>>, vector<16x128xf32>,
    return
  }
  func.func @transform_0(%arg0: i32) -> (i32, i32) {
    %c0_i32 = arith.constant 0 : i32
    %c0_i32_0 = arith.constant 0 : i32
    return %arg0, %c0_i32 : i32, i32
  }
  func.func @transform_1(%arg0: i32) -> (i32, i32) {
    %c0_i32 = arith.constant 0 : i32
    %c0_i32_0 = arith.constant 0 : i32
    return %arg0, %c0_i32 : i32, i32
  }
}

</mosaic_0001>

<llo_original>
// kernel: tpu_custom_call.1
$region0: #{tpu_custom_call.1}
  #allocation0 [shape = 'u32[]', space=smem, size = 0x4, offset = 0x4, fixed_abs, tag = 'smem constant byte address 0x4 - core index']
  #allocation1 [shape = 'u32[72,128]{1,0:T(1,128)}', space=vmem, size = 0x9000, scoped, tag = 'internal scratch']
  %s0 = inlined_call_operand.hbm [shape: f32[16,128], index: 0, kind: input, shape index: {}]
  %s1 = inlined_call_operand.hbm [shape: f32[16,128], index: 1, kind: output, shape index: {}]
  %s2 = sld [smem:[#allocation0]]
  $region18: #{tpu_custom_call.1} parent=0
    _
  %s4 = ssub.s32 1, %s2
  %s5 = scalar_select 0, %s4, %s2
  $region1: #{tpu_custom_call.1} parent=0
    #allocation2 [shape = 'u8[8192]{0}', space=vmem, size = 0x2000, scoped, tag = 'input window, operand 0, single buffered']
    #allocation3 [shape = 's32[1]{0}', space=sflag, size = 0x4, scoped, tag = 'scoped memory for tpu_custom_call.1']
    #allocation4 [shape = 's32[1]{0}', space=sflag, size = 0x4, scoped, tag = 'scoped memory for tpu_custom_call.1']
    #allocation5 [shape = 'u8[8192]{0}', space=vmem, size = 0x2000, scoped, tag = 'output window, operand 0, single buffered']
    %6 = vsyncpa [#allocation3], 0
    %7 = vsyncpa [#allocation4], 0
    // Predicated region
    $region2: #{tpu_custom_call.1} parent=1 // pred_check
      _
    $region3: #{tpu_custom_call.1} parent=1 // pred_check_branch
      %9 = sbr.rel (0) target = $region5
    $region4: #{tpu_custom_call.1} parent=1 // pred_region
      %11 = vsyncadd [#allocation3], 0
      %s12 = sshll.u32 %s0, 4
      %s13 = int_to_ptr.hbm [resolvable:$true] %s12
      %s14 = sshll.u32 [#allocation2], 4
      %s15 = int_to_ptr.vmem [resolvable:$true] %s14
      %20 = dma.hbm_to_vmem [thread:$0]  %s13, 256, %s15, [#allocation3], 128, 128, 8
    $region5: #{tpu_custom_call.1} parent=1 // pred_fallthru
      _
    // Predicated region
    $region6: #{tpu_custom_call.1} parent=1 // pred_check
      _
    $region7: #{tpu_custom_call.1} parent=1 // pred_check_branch
      %22 = sbr.rel (0) target = $region9
    $region8: #{tpu_custom_call.1} parent=1 // pred_region
      %24 = dma.done [#allocation3], 256
    $region9: #{tpu_custom_call.1} parent=1 // pred_fallthru
      _
    %v25 = vld [vmem:[#allocation2] sm:$0xff]
    %v26 = vld [vmem:[#allocation2 + $0x8] sm:$0xff]
    %v27 = vmax.f32 %v25, -5.0
    %v28 = vmax.f32 %v26, -5.0
    %v29 = vmin.f32 %v27, 5.0
    %v30 = vmin.f32 %v28, 5.0
    %31 = vst [vmem:[#allocation5] sm:$0xff] %v29
    %32 = vst [vmem:[#allocation5 + $0x8] sm:$0xff] %v30
    // Predicated region
    $region10: #{tpu_custom_call.1} parent=1 // pred_check
      _
    $region11: #{tpu_custom_call.1} parent=1 // pred_check_branch
      %34 = sbr.rel (0) target = $region13
    $region12: #{tpu_custom_call.1} parent=1 // pred_region
      %36 = vsyncadd [#allocation4], 0
      %s37 = sshll.u32 [#allocation5], 4
      %s38 = int_to_ptr.vmem [resolvable:$true] %s37
      %s39 = sshll.u32 %s1, 4
      %s40 = int_to_ptr.hbm [resolvable:$true] %s39
      %45 = dma.vmem_to_hbm [thread:$0]  %s38, 256, %s40, [#allocation4], 128, 128, 8
    $region13: #{tpu_custom_call.1} parent=1 // pred_fallthru
      _
    // Predicated region
    $region14: #{tpu_custom_call.1} parent=1 // pred_check
      _
    $region15: #{tpu_custom_call.1} parent=1 // pred_check_branch
      %47 = sbr.rel (0) target = $region17
    $region16: #{tpu_custom_call.1} parent=1 // pred_region
      %49 = dma.done [#allocation4], 256
    $region17: #{tpu_custom_call.1} parent=1 // pred_fallthru
      _
    %50 = vsyncpa [#allocation3], 1
    %51 = vsyncpa [#allocation4], 1

</llo_original>
